<compile_context>
chip_gen: v7x
topology: tpu7x:2x2x1
jax: 0.10.0
libtpu: 0.0.40
codegen_flags: <defaults>
</compile_context>

<pallas_src>
import functools

import jax
import jax.numpy as jnp
from jax.experimental import pallas as pl
from jax.experimental.pallas import tpu as pltpu

_UNROLL_MAX_K = 8  # small windows: unrolled slice-accumulate; larger: MXU band


def _moving_avg_kernel(x_ref, out_ref, xpad_ref, *, kernel_size, stride, pad,
                       pad_off, seq_len, l_out, use_mxu):
    """One (batch-tile, channel-tile) block.

    x_ref    : (TB, L, tc)           unpadded input tile (original dtype)
    out_ref  : (TB, L_out, tc)       output tile
    xpad_ref : (TB, pad_off+L+pad, tc) scratch in the input dtype
               (edge-replicated series starts at sublane-aligned `pad_off`).
    """
    tb, _, tc = out_ref.shape
    l_pad = seq_len + 2 * pad
    base = pad_off - pad  # start of the logical padded series inside scratch

    x = x_ref[...]  # (TB, L, tc), input dtype; single read of the input block.
    # Interior store starts at a sublane-aligned static offset -> plain vst.
    xpad_ref[:, pl.ds(pad_off, seq_len), :] = x
    if pad > 0:
        xpad_ref[:, pl.ds(base, pad), :] = jnp.broadcast_to(
            x[:, 0:1, :], (tb, pad, tc))
        xpad_ref[:, pl.ds(pad_off + seq_len, pad), :] = jnp.broadcast_to(
            x[:, seq_len - 1:seq_len, :], (tb, pad, tc))

    inv_k = jnp.float32(1.0 / kernel_size)

    if use_mxu:
        # Banded matmul on the MXU: out = (A @ xpad) * (1/K), with A an
        # (l_out, l_pad) 0/1 band.  Band entries are exactly representable in
        # any dtype; the 1/K scale is applied afterwards in f32.
        row = jax.lax.broadcasted_iota(jnp.int32, (l_out, l_pad), 0)
        col = jax.lax.broadcasted_iota(jnp.int32, (l_out, l_pad), 1)
        band = jnp.logical_and(col >= row * stride,
                               col < row * stride + kernel_size)
        a_band = band.astype(x_ref.dtype)
        for b in range(tb):
            xp = xpad_ref[b, pl.ds(base, l_pad), :]
            acc = jnp.dot(a_band, xp,
                          preferred_element_type=jnp.float32,
                          precision=jax.lax.Precision.HIGHEST)
            out_ref[b, :, :] = (acc * inv_k).astype(out_ref.dtype)
    else:
        # Small K: unrolled (strided) ref reads from the padded scratch,
        # upcast per-term and accumulated in f32.
        def term(k):
            if stride == 1:
                return xpad_ref[:, pl.ds(base + k, l_out), :]
            return xpad_ref[:, pl.ds(base + k, l_out, stride=stride), :]

        acc = term(0).astype(jnp.float32)
        for k in range(1, kernel_size):
            acc = acc + term(k).astype(jnp.float32)
        out_ref[...] = (acc * inv_k).astype(out_ref.dtype)


def _vmem_budget():
    """Generation-aware per-block VMEM budget and scoped-VMEM limit."""
    try:
        cap = int(pltpu.get_tpu_info().vmem_capacity_bytes)
    except Exception:
        cap = 64 * 1024 * 1024  # conservative fallback (v7x-sized)
    if cap <= 64 * 1024 * 1024:
        budget = 40 * 1024 * 1024   # v7x: 64 MiB physical, keep headroom
    else:
        budget = 64 * 1024 * 1024   # v5e/v6e: 128 MiB physical
    vmem_limit = min(cap - 8 * 1024 * 1024, budget + 16 * 1024 * 1024)
    return budget, vmem_limit


def _pick_tiles(B, C, L, l_out, l_pad_alloc, itemsize, kernel_size, budget):
    """Choose (batch tile, channel tile) for the grid."""
    # Lane tile: keep the last dim lane-dense (multiple of 128) when possible.
    if C % 128 == 0:
        if C % 512 == 0:
            tc = 512
        elif C % 256 == 0:
            tc = 256
        else:
            tc = 128
        tc = min(tc, C)
    else:
        tc = C  # block must equal the full dim to satisfy the (8,128) rule

    # Per-batch-row VMEM bytes of one grid step: double-buffered in/out blocks
    # + padded scratch (kept in the input dtype).
    per_b = tc * itemsize * (2 * L + 2 * l_out + l_pad_alloc)
    eff_budget = budget
    if kernel_size <= _UNROLL_MAX_K:
        # Unrolled path keeps a live f32 accumulator (+ one upcast term);
        # bound the compute working set so it does not thrash VMEM/vregs.
        per_b += 2 * 4 * l_out * tc
        eff_budget = min(budget, 8 * 1024 * 1024)

    tb = 1
    for cand in range(B, 0, -1):
        if B % cand == 0 and cand * per_b <= eff_budget:
            tb = cand
            break

    # v7x has 2 TensorCores: keep >= 2 'parallel' grid steps when we can.
    n_ct = C // tc
    if B > 1 and n_ct * (B // tb) < 2:
        for cand in range(tb - 1, 0, -1):
            if B % cand == 0 and B // cand >= 2:
                tb = cand
                break
    return tb, tc


def moving_avg(x, kernel_size, stride):
    """x: (B, L, C) -> (B, L_out, C); matches the PyTorch moving_avg module."""
    B, L, C = x.shape
    pad = (kernel_size - 1) // 2
    l_pad = L + 2 * pad
    l_out = (l_pad - kernel_size) // stride + 1
    itemsize = jnp.dtype(x.dtype).itemsize

    # Sublane-aligned start of the unpadded series inside the scratch buffer.
    sub = max(8, 32 // itemsize)
    pad_off = 0 if pad == 0 else ((pad + sub - 1) // sub) * sub
    l_pad_alloc = pad_off + L + pad

    budget, vmem_limit = _vmem_budget()
    tb, tc = _pick_tiles(B, C, L, l_out, l_pad_alloc, itemsize, kernel_size,
                         budget)

    kernel = functools.partial(
        _moving_avg_kernel,
        kernel_size=kernel_size,
        stride=stride,
        pad=pad,
        pad_off=pad_off,
        seq_len=L,
        l_out=l_out,
        use_mxu=kernel_size > _UNROLL_MAX_K,
    )

    cost = pl.CostEstimate(
        flops=B * l_out * C * (kernel_size + 1),
        transcendentals=0,
        bytes_accessed=(B * L * C + B * l_out * C) * itemsize,
    )

    return pl.pallas_call(
        kernel,
        out_shape=jax.ShapeDtypeStruct((B, l_out, C), x.dtype),
        grid_spec=pltpu.PrefetchScalarGridSpec(
            num_scalar_prefetch=0,
            grid=(B // tb, C // tc),
            in_specs=[pl.BlockSpec((tb, L, tc), lambda b, c: (b, 0, c))],
            out_specs=pl.BlockSpec((tb, l_out, tc), lambda b, c: (b, 0, c)),
            scratch_shapes=[pltpu.VMEM((tb, l_pad_alloc, tc), x.dtype)],
        ),
        compiler_params=pltpu.CompilerParams(
            dimension_semantics=("parallel", "parallel"),
            vmem_limit_bytes=vmem_limit,
        ),
        cost_estimate=cost,
    )(x)


def _moving_avg_ref(x, kernel_size, stride):
    """Pure-JAX reference mirroring the PyTorch semantics exactly."""
    pad = (kernel_size - 1) // 2
    front = jnp.repeat(x[:, 0:1, :], pad, axis=1)
    end = jnp.repeat(x[:, -1:, :], pad, axis=1)
    xpad = jnp.concatenate([front, x, end], axis=1)
    l_pad = xpad.shape[1]
    l_out = (l_pad - kernel_size) // stride + 1
    cols = []
    for t in range(l_out):
        cols.append(
            jnp.mean(xpad[:, t * stride: t * stride + kernel_size, :], axis=1))
    return jnp.stack(cols, axis=1)


if __name__ == "__main__":
    key = jax.random.PRNGKey(0)

    configs = [
        # (B, L, C, kernel_size, stride, tol)
        (2, 16, 8, 5, 1, 1e-5),     # small-C usage (odd K, stride 1)
        (2, 24, 256, 4, 1, 1e-5),   # even kernel, lane-dense channels
        (2, 16, 8, 3, 2, 1e-5),     # strided pooling path
        (2, 96, 128, 25, 1, 1e-4),  # Autoformer-default K -> banded-MXU path
    ]
    for i, (B, L, C, K, S, tol) in enumerate(configs):
        k = jax.random.fold_in(key, i)
        x = jax.random.normal(k, (B, L, C), dtype=jnp.float32)

        out = jax.block_until_ready(moving_avg(x, K, S))
        ref = _moving_avg_ref(x, K, S)

        assert out.shape == ref.shape, (out.shape, ref.shape)
        assert jnp.allclose(out, ref, atol=tol, rtol=tol), \
            f"mismatch vs reference for config {(B, L, C, K, S)}"

    print("KERNEL_OK")
</pallas_src>

<mosaic_0001>
module attributes {stable_mosaic.version = 11 : i64} {
  func.func @_moving_avg_kernel(%arg0: i32, %arg1: i32, %arg2: memref<1x16x8xf32, #tpu.memory_space<vmem>>, %arg3: memref<1x16x8xf32, #tpu.memory_space<vmem>>, %arg4: memref<1x26x8xf32, #tpu.memory_space<vmem>>) attributes {dimension_semantics = [#tpu.dimension_semantics<parallel>, #tpu.dimension_semantics<parallel>], iteration_bounds = array<i64: 2, 1>, scalar_prefetch = 0 : i64, scratch_operands = 1 : i64, tpu.core_type = #tpu.core_type<tc>, window_params = [{transform_indices = @transform_0, window_bounds = array<i64: 1, 16, 8>}, {transform_indices = @transform_1, window_bounds = array<i64: 1, 16, 8>}]} {
    %c0 = arith.constant 0 : index
    %c0_0 = arith.constant 0 : index
    %c0_1 = arith.constant 0 : index
    %0 = vector.load %arg2[%c0, %c0_0, %c0_1] : memref<1x16x8xf32, #tpu.memory_space<vmem>>, vector<1x16x8xf32>
    %c0_2 = arith.constant 0 : index
    %c8 = arith.constant 8 : index
    %c0_3 = arith.constant 0 : index
    %1 = vector.load %arg4[%c0_2, %c8, %c0_3] : memref<1x26x8xf32, #tpu.memory_space<vmem>>, vector<1x16x8xf32>
    tpu.vector_store %arg4[%c0_2, %c8, %c0_3], %0 {strides = array<i32>} : memref<1x26x8xf32, #tpu.memory_space<vmem>>, vector<1x16x8xf32>,
    %2 = vector.extract_strided_slice %0 {offsets = [0, 0, 0], sizes = [1, 1, 8], strides = [1, 1, 1]} : vector<1x16x8xf32> to vector<1x1x8xf32>
    %3 = vector.shape_cast %2 : vector<1x1x8xf32> to vector<1x1x8xf32>
    %4 = vector.broadcast %3 : vector<1x1x8xf32> to vector<1x2x8xf32>
    %c0_4 = arith.constant 0 : index
    %c6 = arith.constant 6 : index
    %c0_5 = arith.constant 0 : index
    %5 = vector.load %arg4[%c0_4, %c6, %c0_5] : memref<1x26x8xf32, #tpu.memory_space<vmem>>, vector<1x2x8xf32>
    tpu.vector_store %arg4[%c0_4, %c6, %c0_5], %4 {strides = array<i32>} : memref<1x26x8xf32, #tpu.memory_space<vmem>>, vector<1x2x8xf32>,
    %6 = vector.extract_strided_slice %0 {offsets = [0, 15, 0], sizes = [1, 1, 8], strides = [1, 1, 1]} : vector<1x16x8xf32> to vector<1x1x8xf32>
    %7 = vector.shape_cast %6 : vector<1x1x8xf32> to vector<1x1x8xf32>
    %8 = vector.broadcast %7 : vector<1x1x8xf32> to vector<1x2x8xf32>
    %c0_6 = arith.constant 0 : index
    %c24 = arith.constant 24 : index
    %c0_7 = arith.constant 0 : index
    %9 = vector.load %arg4[%c0_6, %c24, %c0_7] : memref<1x26x8xf32, #tpu.memory_space<vmem>>, vector<1x2x8xf32>
    tpu.vector_store %arg4[%c0_6, %c24, %c0_7], %8 {strides = array<i32>} : memref<1x26x8xf32, #tpu.memory_space<vmem>>, vector<1x2x8xf32>,
    %c0_8 = arith.constant 0 : index
    %c6_9 = arith.constant 6 : index
    %c0_10 = arith.constant 0 : index
    %10 = vector.load %arg4[%c0_8, %c6_9, %c0_10] : memref<1x26x8xf32, #tpu.memory_space<vmem>>, vector<1x16x8xf32>
    %c0_11 = arith.constant 0 : index
    %c7 = arith.constant 7 : index
    %c0_12 = arith.constant 0 : index
    %11 = vector.load %arg4[%c0_11, %c7, %c0_12] : memref<1x26x8xf32, #tpu.memory_space<vmem>>, vector<1x16x8xf32>
    %12 = arith.addf %10, %11 : vector<1x16x8xf32>
    %c0_13 = arith.constant 0 : index
    %c8_14 = arith.constant 8 : index
    %c0_15 = arith.constant 0 : index
    %13 = vector.load %arg4[%c0_13, %c8_14, %c0_15] : memref<1x26x8xf32, #tpu.memory_space<vmem>>, vector<1x16x8xf32>
    %14 = arith.addf %12, %13 : vector<1x16x8xf32>
    %c0_16 = arith.constant 0 : index
    %c9 = arith.constant 9 : index
    %c0_17 = arith.constant 0 : index
    %15 = vector.load %arg4[%c0_16, %c9, %c0_17] : memref<1x26x8xf32, #tpu.memory_space<vmem>>, vector<1x16x8xf32>
    %16 = arith.addf %14, %15 : vector<1x16x8xf32>
    %c0_18 = arith.constant 0 : index
    %c10 = arith.constant 10 : index
    %c0_19 = arith.constant 0 : index
    %17 = vector.load %arg4[%c0_18, %c10, %c0_19] : memref<1x26x8xf32, #tpu.memory_space<vmem>>, vector<1x16x8xf32>
    %18 = arith.addf %16, %17 : vector<1x16x8xf32>
    %cst = arith.constant 2.000000e-01 : f32
    %19 = vector.broadcast %cst : f32 to vector<1x16x8xf32>
    %20 = arith.mulf %18, %19 : vector<1x16x8xf32>
    %c0_20 = arith.constant 0 : index
    %c0_21 = arith.constant 0 : index
    %c0_22 = arith.constant 0 : index
    %21 = vector.load %arg3[%c0_20, %c0_21, %c0_22] : memref<1x16x8xf32, #tpu.memory_space<vmem>>, vector<1x16x8xf32>
    tpu.vector_store %arg3[%c0_20, %c0_21, %c0_22], %20 {strides = array<i32>} : memref<1x16x8xf32, #tpu.memory_space<vmem>>, vector<1x16x8xf32>,
    return
  }
  func.func @transform_0(%arg0: i32, %arg1: i32) -> (i32, i32, i32) {
    %c0_i32 = arith.constant 0 : i32
    %c0_i32_0 = arith.constant 0 : i32
    return %arg0, %c0_i32, %arg1 : i32, i32, i32
  }
  func.func @transform_1(%arg0: i32, %arg1: i32) -> (i32, i32, i32) {
    %c0_i32 = arith.constant 0 : i32
    %c0_i32_0 = arith.constant 0 : i32
    return %arg0, %c0_i32, %arg1 : i32, i32, i32
  }
}

</mosaic_0001>

<llo_original>
// kernel: tpu_custom_call.1
$region0: #{tpu_custom_call.1}
  #allocation0 [shape = 'u32[]', space=smem, size = 0x4, offset = 0x4, fixed_abs, tag = 'smem constant byte address 0x4 - core index']
  #allocation1 [shape = 'u32[144,128]{1,0:T(1,128)}', space=vmem, size = 0x12000, scoped, tag = 'internal scratch']
  #allocation2 [shape = 'f32[1,26,8]{2,1,0:T(8,128)}', space=vmem, size = 0x4000, scoped, tag = 'scratch operand']
  %s0 = inlined_call_operand.vmem [shape: f32[2,16,8], index: 0, kind: input, shape index: {}]
  %s1 = inlined_call_operand.vmem [shape: f32[2,16,8], index: 1, kind: output, shape index: {}]
  %s2 = sld [smem:[#allocation0]]
  $region37: #{tpu_custom_call.1} parent=0
    _
  %s4 = ssub.s32 1, %s2
  %s5 = scalar_select 0, %s4, %s2
  loop: start=0, step=1, limit=4
  $region2: #{tpu_custom_call.1} parent=0 // loop_pre_header
    _
  $region3: #{tpu_custom_call.1} parent=0 // loop_header
    %s7 = sphi 0, %s11
    %p8 = scmp.ge.s32.totalorder %s7, 4
    %s14 = sphi 0, %s26
    %s15 = sphi 0, %s22
    %s16 = sphi 0, %s14
    %s17 = sphi 0, %s15
    %s18 = sphi 0, %s16
    %s19 = sphi 0, %s17
    %s31 = sphi 0, %s33
    %s34 = sphi 0, %s31
    %s35 = sphi 0, %s34
    %s51 = sphi 0, %s35
    %s59 = sphi 0, %s61
    %s62 = sphi 0, %s59
    %s63 = sphi 0, %s62
    %s79 = sphi 0, %s63
  $region4: #{tpu_custom_call.1} parent=0 // loop_header_branch
    %10 = sbr.rel (%p8) target = $region8
  $region5: #{tpu_custom_call.1} parent=0 // loop_body
    %s12 = ssub.s32 %s7, 1
    %s13 = ssub.s32 %s7, 2
    %s20 = sadd.s32 1, %s15
    %p21 = scmp.ge.s32.totalorder %s20, 1
    %s22 = scalar_select %p21, 0, %s20
    %s23 = sadd.s32 1, %s14
    %s24 = scalar_select %p21, %s23, %s14
    %p25 = scmp.ge.s32.totalorder %s24, 2
    %s26 = scalar_select %p25, 0, %s24
    %s27 = ssub.s32 %s14, %s26
    %s28 = ssub.s32 %s15, %s22
    %s29 = sor.u32 %s27, %s28
    %p30 = scmp.eq.s32.totalorder %s29, 0
    %s32 = sadd.s32 %s31, 1
    %s33 = scalar_select %p30, %s31, %s32
    %p36 = pneg %p30
    %p37 = scmp.eq.s32.totalorder %s7, 1
    %p38 = por %p36, %p37
    %p39 = scmp.ne.s32.totalorder %s31, %s34
    %p40 = scmp.eq.s32.totalorder %s7, 0
    %p41 = por %p39, %p40
    %p42 = scmp.ne.s32.totalorder %s31, %s34
    %p43 = scmp.eq.s32.totalorder %s12, 1
    %p44 = por %p42, %p43
    %p45 = scmp.ne.s32.totalorder %s34, %s35
    %p46 = scmp.eq.s32.totalorder %s12, 0
    %p47 = por %p45, %p46
    %p48 = scmp.ne.s32.totalorder %s34, %s35
    %p49 = scmp.eq.s32.totalorder %s13, 1
    %p50 = por %p48, %p49
    %p52 = scmp.ne.s32.totalorder %s35, %s51
    %p53 = scmp.eq.s32.totalorder %s13, 0
    %p54 = por %p52, %p53
    %s55 = ssub.s32 %s14, %s26
    %s56 = ssub.s32 %s15, %s22
    %s57 = sor.u32 %s55, %s56
    %p58 = scmp.eq.s32.totalorder %s57, 0
    %s60 = sadd.s32 %s59, 1
    %s61 = scalar_select %p58, %s59, %s60
    %p64 = pneg %p58
    %p65 = scmp.eq.s32.totalorder %s7, 1
    %p66 = por %p64, %p65
    %p67 = scmp.ne.s32.totalorder %s59, %s62
    %p68 = scmp.eq.s32.totalorder %s7, 0
    %p69 = por %p67, %p68
    %p70 = scmp.ne.s32.totalorder %s59, %s62
    %p71 = scmp.eq.s32.totalorder %s12, 1
    %p72 = por %p70, %p71
    %p73 = scmp.ne.s32.totalorder %s62, %s63
    %p74 = scmp.eq.s32.totalorder %s12, 0
    %p75 = por %p73, %p74
    %p76 = scmp.ne.s32.totalorder %s62, %s63
    %p77 = scmp.eq.s32.totalorder %s13, 1
    %p78 = por %p76, %p77
    %p80 = scmp.ne.s32.totalorder %s63, %s79
    %p81 = scmp.eq.s32.totalorder %s13, 0
    %p82 = por %p80, %p81
    %p83 = scmp.le.s32.totalorder 1, %s7
    %p84 = scmp.lt.s32.totalorder %s7, 3
    %p85 = pnand %p83, %p84
    %p86 = pneg %p85
    // Predicated region
    $region9: #{tpu_custom_call.1} parent=5 // pred_check
      _
    $region10: #{tpu_custom_call.1} parent=5 // pred_check_branch
      %88 = sbr.rel (%p85) target = $region12
    $region11: #{tpu_custom_call.1} parent=5 // pred_region
      %s89 = ssub.s32 %s7, 1
    $region12: #{tpu_custom_call.1} parent=5 // pred_fallthru
      _
    %p90 = scmp.lt.s32.totalorder %s7, 2
    // Predicated region
    $region13: #{tpu_custom_call.1} parent=5 // pred_check
      %p91 = pneg %p90
    $region14: #{tpu_custom_call.1} parent=5 // pred_check_branch
      %93 = sbr.rel (%p91) target = $region16
    $region15: #{tpu_custom_call.1} parent=5 // pred_region
      // Predicated region
      $region17: #{tpu_custom_call.1} parent=15 // pred_check
        %p94 = pneg %p41
      $region18: #{tpu_custom_call.1} parent=15 // pred_check_branch
        %96 = sbr.rel (%p94) target = $region20
      $region19: #{tpu_custom_call.1} parent=15 // pred_region
        %p97 = scmp.lt.s32.totalorder %s14, 1
        %s98 = scalar_select %p97, %s14, 1
        %p99 = scmp.lt.s32.totalorder %s15, 0
        %s100 = scalar_select %p99, %s15, 0
        %s101 = smul.addr %s98, 2
        %s102 = sadd.s32 %s100, %s101
        %s103 = smul.addr %s102, 8
        %s104 = scalar_lea.vmem %s0, %s103
      $region20: #{tpu_custom_call.1} parent=15 // pred_fallthru
        _
    $region16: #{tpu_custom_call.1} parent=5 // pred_fallthru
      _
    %p105 = scmp.le.s32.totalorder 1, %s7
    %p106 = scmp.lt.s32.totalorder %s7, 3
    %p107 = pnand %p105, %p106
    %p108 = pneg %p107
    // Predicated region
    $region21: #{tpu_custom_call.1} parent=5 // pred_check
      _
    $region22: #{tpu_custom_call.1} parent=5 // pred_check_branch
      %110 = sbr.rel (%p107) target = $region24
    $region23: #{tpu_custom_call.1} parent=5 // pred_region
      %s111 = ssub.s32 %s7, 1
      %p112 = scmp.lt.s32.totalorder %s16, 1
      %s113 = scalar_select %p112, %s16, 1
      %p114 = scmp.lt.s32.totalorder %s17, 0
      %s115 = scalar_select %p114, %s17, 0
      %s116 = smul.addr %s113, 2
      %s117 = sadd.s32 %s115, %s116
      %s118 = smul.addr %s117, 8
      %s119 = scalar_lea.vmem %s0, %s118
      %p120 = pneg %p47
      %p121 = pneg %p44
      %p122 = pneg %p75
      %p123 = pneg %p72
      %p124 = scmp.lt.s32.totalorder %s16, 1
      %s125 = scalar_select %p124, %s16, 1
      %p126 = scmp.lt.s32.totalorder %s17, 0
      %s127 = scalar_select %p126, %s17, 0
      %s128 = smul.addr %s125, 2
      %s129 = sadd.s32 %s127, %s128
      %s130 = smul.addr %s129, 8
      %s131 = scalar_lea.vmem %s1, %s130
      %p132 = scmp.lt.s32.totalorder %s16, 1
      %s133 = scalar_select %p132, %s16, 1
      %p134 = scmp.lt.s32.totalorder %s17, 0
      %s135 = scalar_select %p134, %s17, 0
      %s136 = smul.addr %s133, 2
      %s137 = sadd.s32 %s135, %s136
      %s138 = smul.addr %s137, 8
      %s139 = scalar_lea.vmem %s0, %s138
      %p140 = scmp.lt.s32.totalorder %s16, 1
      %s141 = scalar_select %p140, %s16, 1
      %p142 = scmp.lt.s32.totalorder %s17, 0
      %s143 = scalar_select %p142, %s17, 0
      %s144 = smul.addr %s141, 2
      %s145 = sadd.s32 %s143, %s144
      %s146 = smul.addr %s145, 8
      %s147 = scalar_lea.vmem %s1, %s146
      %v148 = vld [vmem:[%s139] sm:$0xff]
      %v149 = vld [vmem:[%s139 + $0x8] sm:$0xff]
      %vm150 = vcmask 64512
      %151 = vst.msk [vmem:[#allocation2 + $0x8] sm:$0xff] %vm150, %v148
      %152 = vst.msk [vmem:[#allocation2 + $0x10] sm:$0xff] %vm150, %v149
      %v153 = vlaneseq
      %v154 = vshrl.u32 %v153, 7
      %v155 = vsub.s32 0, %v154
      %v156 = vrot.slane %v148, %v155
      %vm157 = vcmask 58368
      %158 = vst.msk [vmem:[#allocation2 + $0x6] sm:$0x3] %vm157, %v156
      %v159 = vlaneseq
      %v160 = vshrl.u32 %v159, 7
      %v161 = vsub.s32 7, %v160
      %v162 = vrot.slane %v149, %v161
      %163 = vst.msk [vmem:[#allocation2 + $0x18] sm:$0x3] %vm157, %v162
      %v164 = vld [vmem:[#allocation2 + $0x6] sm:$0xff]
      %v165 = vld [vmem:[#allocation2 + $0xe] sm:$0xff]
      %v166 = vld [vmem:[#allocation2 + $0x7] sm:$0xff]
      %v167 = vld [vmem:[#allocation2 + $0xf] sm:$0xff]
      %v168 = vadd.f32 %v164, %v166
      %v169 = vadd.f32 %v165, %v167
      %v170 = vld [vmem:[#allocation2 + $0x8] sm:$0xff]
      %v171 = vld [vmem:[#allocation2 + $0x10] sm:$0xff]
      %v172 = vadd.f32 %v168, %v170
      %v173 = vadd.f32 %v169, %v171
      %v174 = vld [vmem:[#allocation2 + $0x9] sm:$0xff]
      %v175 = vld [vmem:[#allocation2 + $0x11] sm:$0xff]
      %v176 = vadd.f32 %v172, %v174
      %v177 = vadd.f32 %v173, %v175
      %v178 = vld [vmem:[#allocation2 + $0xa] sm:$0xff]
      %v179 = vld [vmem:[#allocation2 + $0x12] sm:$0xff]
      %v180 = vadd.f32 %v176, %v178
      %v181 = vadd.f32 %v177, %v179
      %v182 = vmul.f32 %v180, 0.2
      %v183 = vmul.f32 %v181, 0.2
      %184 = vst.msk [vmem:[%s147] sm:$0xff] %vm150, %v182
      %185 = vst.msk [vmem:[%s147 + $0x8] sm:$0xff] %vm150, %v183
      %p186 = scmp.lt.s32.totalorder %s16, 1
      %s187 = scalar_select %p186, %s16, 1
      %p188 = scmp.lt.s32.totalorder %s17, 0
      %s189 = scalar_select %p188, %s17, 0
      %s190 = smul.addr %s187, 2
      %s191 = sadd.s32 %s189, %s190
      %s192 = smul.addr %s191, 8
      %s193 = scalar_lea.vmem %s1, %s192
      // Predicated region
      $region25: #{tpu_custom_call.1} parent=23 // pred_check
        %p194 = pneg %p72
      $region26: #{tpu_custom_call.1} parent=23 // pred_check_branch
        %196 = sbr.rel (%p194) target = $region28
      $region27: #{tpu_custom_call.1} parent=23 // pred_region
        _
      $region28: #{tpu_custom_call.1} parent=23 // pred_fallthru
        _
    $region24: #{tpu_custom_call.1} parent=5 // pred_fallthru
      _
    %p197 = scmp.le.s32.totalorder 2, %s7
    // Predicated region
    $region29: #{tpu_custom_call.1} parent=5 // pred_check
      %p198 = pneg %p197
    $region30: #{tpu_custom_call.1} parent=5 // pred_check_branch
      %200 = sbr.rel (%p198) target = $region32
    $region31: #{tpu_custom_call.1} parent=5 // pred_region
      %s201 = ssub.s32 %s7, 2
      // Predicated region
      $region33: #{tpu_custom_call.1} parent=31 // pred_check
        %p202 = pneg %p78
      $region34: #{tpu_custom_call.1} parent=31 // pred_check_branch
        %204 = sbr.rel (%p202) target = $region36
      $region35: #{tpu_custom_call.1} parent=31 // pred_region
        %p205 = scmp.lt.s32.totalorder %s18, 1
        %s206 = scalar_select %p205, %s18, 1
        %p207 = scmp.lt.s32.totalorder %s19, 0
        %s208 = scalar_select %p207, %s19, 0
        %s209 = smul.addr %s206, 2
        %s210 = sadd.s32 %s208, %s209
        %s211 = smul.addr %s210, 8
        %s212 = scalar_lea.vmem %s1, %s211
      $region36: #{tpu_custom_call.1} parent=31 // pred_fallthru
        _
    $region32: #{tpu_custom_call.1} parent=5 // pred_fallthru
      _
  $region6: #{tpu_custom_call.1} parent=0 // loop_footer
    %s11 = sadd.s32 1, %s7
  $region7: #{tpu_custom_call.1} parent=0 // loop_footer_branch
    %6 = sbr.rel target = $region3
  $region8: #{tpu_custom_call.1} parent=0 // loop_exit
    _

</llo_original>
